<compile_context>
chip_gen: v7x
topology: tpu7x:2x2x1
jax: 0.10.0
libtpu: 0.0.40
codegen_flags: <defaults>
</compile_context>

<pallas_src>
import functools

import numpy as np
import jax
import jax.numpy as jnp
from jax import lax
from jax.experimental import pallas as pl
from jax.experimental.pallas import tpu as pltpu


def _pe_add_kernel(feats_ref, consts_ref, out_ref, *, tile_s, max_size):
    si = pl.program_id(1)

    # Flattened sequence positions of this tile: a (1, tile_s, 1) column only;
    # everything per-channel is done via (1, 1, D)-style lane broadcasts.
    row = lax.broadcasted_iota(jnp.int32, (1, tile_s, 1), 1).astype(jnp.float32)
    pos = (si * tile_s).astype(jnp.float32) + row
    y = jnp.floor(pos / jnp.float32(max_size))        # grid row
    x = pos - y * jnp.float32(max_size)               # grid col

    # consts = [ax, ay, phase] as (3, 1, D) f32 lane constants:
    #   arg = x/dim_t on x-channels, y/dim_t on y-channels, +pi/2 on cos slots,
    # so a single transcendental per element: pe = sin(arg).
    c = consts_ref[...]
    arg = x * c[0] + y * c[1] + c[2]
    pe = jnp.sin(arg)                                  # (1, tile_s, D)
    # TODO(synk): if a bundle dump shows the VALU slot saturating on v7x/bf16,
    # exploit that y is constant (except for at most one step) within a tile of
    # <= max_size rows and compute the y-channel sins once per distinct y.

    # Upcast feats, add in f32, single cast on store (bf16-safe, shared PE
    # across the whole batch block).
    out_ref[...] = (feats_ref[...].astype(jnp.float32) + pe).astype(out_ref.dtype)


def _auto_tiles(b, s, d, itemsize, *, budget_bytes=24 << 20, min_seq_steps=4,
                max_tile_s=4096):
    """Pick (tile_b, tile_s) from a VMEM budget; no divisibility requirement."""
    # Sublane alignment: 8 rows for 32-bit dtypes, 16 for 16-bit, 32 for 8-bit.
    row_align = 8 if itemsize >= 4 else (16 if itemsize == 2 else 32)

    def bytes_per_seq_row(tb):
        # Double-buffered feats-in + out blocks, plus the f32 temporaries that
        # live alongside them in the kernel (upcast feats, arg, pe).
        return d * (4 * tb * itemsize + (tb + 3) * 4)

    # Shrink the batch block only if keeping the full batch would force the
    # sequence tile below ~512 rows (off the HBM roofline).
    tile_b = b
    while tile_b > 1 and budget_bytes // bytes_per_seq_row(tile_b) < 512:
        tile_b = max(1, (tile_b + 1) // 2)

    cap = budget_bytes // bytes_per_seq_row(tile_b)
    cap = max(row_align, (cap // row_align) * row_align)
    cap = min(cap, max_tile_s)

    # Guarantee >= min_seq_steps grid steps along the sequence axis so the
    # pipeline has work to overlap and megacore sharding has >=2 tiles per TC.
    want = -(-s // min_seq_steps)
    want = -(-want // row_align) * row_align
    s_pad = -(-s // row_align) * row_align
    tile_s = max(row_align, min(cap, want, s_pad))
    return tile_b, tile_s


def sincos_pe_2d_add(feats, *, max_size=1000, temperature=10000.0,
                     tile_b=None, tile_s=None, donate_feats=False):
    """feats: (B, S, D), D % 4 == 0, S <= max_size**2.  Returns feats + PE."""
    b, s, d = feats.shape
    assert d % 4 == 0, "d_model must be divisible by 4"
    assert s <= max_size * max_size, "sequence length exceeds encoding capacity"
    # y/x recovery relies on pos < max_size^2 being exact in f32 (< 2^24).
    assert max_size <= 4096, "max_size > 4096 loses exact f32 positions"

    # ---- trace-time per-channel constants (channel c = 4*k + g) -------------
    quarter = d // 4
    k = np.arange(d) // 4
    g = np.arange(d) % 4
    inv_dim_t = (1.0 / (temperature ** (k.astype(np.float64) / quarter)))
    ax = np.where(g < 2, inv_dim_t, 0.0)                  # x-channel scales
    ay = np.where(g >= 2, inv_dim_t, 0.0)                 # y-channel scales
    phase = (g % 2).astype(np.float64) * (np.pi / 2)      # cos = sin(. + pi/2)
    consts = np.stack([ax, ay, phase]).astype(np.float32).reshape(3, 1, d)

    # ---- tile sizes from VMEM budget (no "must divide S" requirement) -------
    itemsize = jnp.dtype(feats.dtype).itemsize
    auto_b, auto_s = _auto_tiles(b, s, d, itemsize)
    if tile_b is None:
        tile_b = auto_b
    if tile_s is None:
        tile_s = auto_s
    tile_b = min(tile_b, b)

    grid = (pl.cdiv(b, tile_b), pl.cdiv(s, tile_s))

    kernel = functools.partial(_pe_add_kernel, tile_s=tile_s, max_size=max_size)

    grid_spec = pl.GridSpec(
        grid=grid,
        in_specs=[
            pl.BlockSpec((tile_b, tile_s, d), lambda bi, si: (bi, si, 0)),  # feats
            pl.BlockSpec((3, 1, d), lambda bi, si: (0, 0, 0)),              # consts
        ],
        out_specs=pl.BlockSpec((tile_b, tile_s, d), lambda bi, si: (bi, si, 0)),
    )

    return pl.pallas_call(
        kernel,
        out_shape=jax.ShapeDtypeStruct(feats.shape, feats.dtype),
        grid_spec=grid_spec,
        compiler_params=pltpu.CompilerParams(
            dimension_semantics=("parallel", "parallel"),
            vmem_limit_bytes=32 * 1024 * 1024),
        input_output_aliases={0: 0} if donate_feats else {},
    )(feats, jnp.asarray(consts))


def _reference_pe(s, d, max_size=1000, temperature=10000.0):
    """Pure-JAX mirror of the PyTorch buffer construction (first s rows)."""
    pos = jnp.arange(s, dtype=jnp.float32)
    y = jnp.floor(pos / max_size)
    x = pos - y * max_size
    dim_t = temperature ** (jnp.arange(d // 4, dtype=jnp.float32) / (d // 4))
    pe = jnp.zeros((s, d), jnp.float32)
    pe = pe.at[:, 0::4].set(jnp.sin(x[:, None] / dim_t))
    pe = pe.at[:, 1::4].set(jnp.cos(x[:, None] / dim_t))
    pe = pe.at[:, 2::4].set(jnp.sin(y[:, None] / dim_t))
    pe = pe.at[:, 3::4].set(jnp.cos(y[:, None] / dim_t))
    return pe


if __name__ == "__main__":
    MAX_SIZE, TEMP = 1000, 10000.0
    key = jax.random.PRNGKey(0)

    # ---- float32 path --------------------------------------------------------
    B, S, D = 2, 256, 128
    feats = jax.random.normal(key, (B, S, D), dtype=jnp.float32)
    ref = feats + _reference_pe(S, D, MAX_SIZE, TEMP)[None, :, :]

    out = sincos_pe_2d_add(feats, max_size=MAX_SIZE, temperature=TEMP)
    out = jax.block_until_ready(out)
    assert out.shape == feats.shape and out.dtype == feats.dtype
    assert jnp.allclose(out, ref, atol=2e-3, rtol=1e-3), "f32 mismatch vs reference"

    # ---- ragged S (tile_s does not divide S -> masked partial tail block) ---
    S2 = 250
    feats2 = jax.random.normal(jax.random.PRNGKey(1), (B, S2, D), dtype=jnp.float32)
    ref2 = feats2 + _reference_pe(S2, D, MAX_SIZE, TEMP)[None, :, :]
    out2 = jax.block_until_ready(
        sincos_pe_2d_add(feats2, max_size=MAX_SIZE, temperature=TEMP))
    assert jnp.allclose(out2, ref2, atol=2e-3, rtol=1e-3), "ragged-S mismatch"

    # ---- bf16 path (PE math in f32, single cast on store) -------------------
    feats_bf16 = feats.astype(jnp.bfloat16)
    out_bf16 = jax.block_until_ready(
        sincos_pe_2d_add(feats_bf16, max_size=MAX_SIZE, temperature=TEMP))
    assert out_bf16.dtype == jnp.bfloat16
    assert jnp.allclose(out_bf16.astype(jnp.float32),
                        feats_bf16.astype(jnp.float32)
                        + _reference_pe(S, D, MAX_SIZE, TEMP)[None, :, :],
                        atol=8e-2), "bf16 mismatch vs reference"

    print("KERNEL_OK")
</pallas_src>

<mosaic_0001>
module attributes {stable_mosaic.version = 11 : i64} {
  func.func @_pe_add_kernel(%arg0: i32, %arg1: i32, %arg2: memref<2x64x128xf32, #tpu.memory_space<vmem>>, %arg3: memref<3x1x128xf32, #tpu.memory_space<vmem>>, %arg4: memref<2x64x128xf32, #tpu.memory_space<vmem>>) attributes {dimension_semantics = [#tpu.dimension_semantics<parallel>, #tpu.dimension_semantics<parallel>], iteration_bounds = array<i64: 1, 4>, scalar_prefetch = 0 : i64, scratch_operands = 0 : i64, tpu.core_type = #tpu.core_type<tc>, window_params = [{transform_indices = @transform_0, window_bounds = array<i64: 2, 64, 128>}, {pipeline_mode = #tpu.pipeline_mode<synchronous>, transform_indices = @transform_1, window_bounds = array<i64: 3, 1, 128>}, {transform_indices = @transform_2, window_bounds = array<i64: 2, 64, 128>}]} {
    %0 = tpu.iota {dimensions = array<i32: 1>} : vector<1x64x1xi32>
    %1 = arith.sitofp %0 : vector<1x64x1xi32> to vector<1x64x1xf32>
    %c64_i32 = arith.constant 64 : i32
    %2 = arith.muli %arg1, %c64_i32 : i32
    %3 = arith.sitofp %2 : i32 to f32
    %4 = vector.broadcast %3 : f32 to vector<1x64x1xf32>
    %5 = arith.addf %4, %1 : vector<1x64x1xf32>
    %cst = arith.constant 1.000000e+03 : f32
    %6 = vector.broadcast %cst : f32 to vector<1x64x1xf32>
    %7 = arith.divf %5, %6 : vector<1x64x1xf32>
    %8 = math.floor %7 : vector<1x64x1xf32>
    %cst_0 = arith.constant 1.000000e+03 : f32
    %9 = vector.broadcast %cst_0 : f32 to vector<1x64x1xf32>
    %10 = arith.mulf %8, %9 : vector<1x64x1xf32>
    %11 = arith.subf %5, %10 : vector<1x64x1xf32>
    %c0 = arith.constant 0 : index
    %c0_1 = arith.constant 0 : index
    %c0_2 = arith.constant 0 : index
    %12 = vector.load %arg3[%c0, %c0_1, %c0_2] : memref<3x1x128xf32, #tpu.memory_space<vmem>>, vector<3x1x128xf32>
    %13 = vector.extract_strided_slice %12 {offsets = [0, 0, 0], sizes = [1, 1, 128], strides = [1, 1, 1]} : vector<3x1x128xf32> to vector<1x1x128xf32>
    %14 = vector.shape_cast %13 : vector<1x1x128xf32> to vector<1x128xf32>
    %15 = vector.shape_cast %14 : vector<1x128xf32> to vector<1x1x128xf32>
    %16 = vector.broadcast %11 : vector<1x64x1xf32> to vector<1x64x128xf32>
    %17 = vector.broadcast %15 : vector<1x1x128xf32> to vector<1x64x128xf32>
    %18 = arith.mulf %16, %17 : vector<1x64x128xf32>
    %19 = vector.extract_strided_slice %12 {offsets = [1, 0, 0], sizes = [1, 1, 128], strides = [1, 1, 1]} : vector<3x1x128xf32> to vector<1x1x128xf32>
    %20 = vector.shape_cast %19 : vector<1x1x128xf32> to vector<1x128xf32>
    %21 = vector.shape_cast %20 : vector<1x128xf32> to vector<1x1x128xf32>
    %22 = vector.broadcast %8 : vector<1x64x1xf32> to vector<1x64x128xf32>
    %23 = vector.broadcast %21 : vector<1x1x128xf32> to vector<1x64x128xf32>
    %24 = arith.mulf %22, %23 : vector<1x64x128xf32>
    %25 = arith.addf %18, %24 : vector<1x64x128xf32>
    %26 = vector.extract_strided_slice %12 {offsets = [2, 0, 0], sizes = [1, 1, 128], strides = [1, 1, 1]} : vector<3x1x128xf32> to vector<1x1x128xf32>
    %27 = vector.shape_cast %26 : vector<1x1x128xf32> to vector<1x128xf32>
    %28 = vector.shape_cast %27 : vector<1x128xf32> to vector<1x1x128xf32>
    %29 = vector.broadcast %28 : vector<1x1x128xf32> to vector<1x64x128xf32>
    %30 = arith.addf %25, %29 : vector<1x64x128xf32>
    %31 = math.sin %30 : vector<1x64x128xf32>
    %c0_3 = arith.constant 0 : index
    %c0_4 = arith.constant 0 : index
    %c0_5 = arith.constant 0 : index
    %32 = vector.load %arg2[%c0_3, %c0_4, %c0_5] : memref<2x64x128xf32, #tpu.memory_space<vmem>>, vector<2x64x128xf32>
    %33 = vector.broadcast %31 : vector<1x64x128xf32> to vector<2x64x128xf32>
    %34 = arith.addf %32, %33 : vector<2x64x128xf32>
    %c0_6 = arith.constant 0 : index
    %c0_7 = arith.constant 0 : index
    %c0_8 = arith.constant 0 : index
    %35 = vector.load %arg4[%c0_6, %c0_7, %c0_8] : memref<2x64x128xf32, #tpu.memory_space<vmem>>, vector<2x64x128xf32>
    tpu.vector_store %arg4[%c0_6, %c0_7, %c0_8], %34 {strides = array<i32>} : memref<2x64x128xf32, #tpu.memory_space<vmem>>, vector<2x64x128xf32>,
    return
  }
  func.func @transform_0(%arg0: i32, %arg1: i32) -> (i32, i32, i32) {
    %c0_i32 = arith.constant 0 : i32
    %c0_i32_0 = arith.constant 0 : i32
    return %arg0, %arg1, %c0_i32 : i32, i32, i32
  }
  func.func @transform_1(%arg0: i32, %arg1: i32) -> (i32, i32, i32) {
    %c0_i32 = arith.constant 0 : i32
    %c0_i32_0 = arith.constant 0 : i32
    %c0_i32_1 = arith.constant 0 : i32
    %c0_i32_2 = arith.constant 0 : i32
    return %c0_i32, %c0_i32_0, %c0_i32_1 : i32, i32, i32
  }
  func.func @transform_2(%arg0: i32, %arg1: i32) -> (i32, i32, i32) {
    %c0_i32 = arith.constant 0 : i32
    %c0_i32_0 = arith.constant 0 : i32
    return %arg0, %arg1, %c0_i32 : i32, i32, i32
  }
}

</mosaic_0001>

<llo_original>
// kernel: tpu_custom_call.1
$region0: #{tpu_custom_call.1}
  #allocation0 [shape = 'u32[]', space=smem, size = 0x4, offset = 0x4, fixed_abs, tag = 'smem constant byte address 0x4 - core index']
  #allocation1 [shape = 'u32[144,128]{1,0:T(1,128)}', space=vmem, size = 0x12000, scoped, tag = 'internal scratch']
  #allocation6 [shape = 's32[]', space=sflag, size = 0x4, offset = 0, fixed_abs, tag = 'sflag constant byte address 0x0 - dummy sync flag']
  #allocation8 [shape = 's32[]', space=sflag, size = 0x4, offset = 0, fixed_abs, tag = 'sflag constant byte address 0x0 - dummy sync flag']
  %s0 = inlined_call_operand.hbm [shape: f32[2,256,128], index: 0, kind: input, shape index: {}]
  %s1 = inlined_call_operand.vmem [shape: f32[3,1,128], index: 1, kind: input, shape index: {}]
  %s2 = inlined_call_operand.hbm [shape: f32[2,256,128], index: 2, kind: output, shape index: {}]
  %s3 = sld [smem:[#allocation0]]
  $region45: #{tpu_custom_call.1} parent=0
    _
  %s5 = ssub.s32 1, %s3
  %s6 = scalar_select 0, %s5, %s3
  $region1: #{tpu_custom_call.1} parent=0
    #allocation2 [shape = 'u8[131072]{0}', space=vmem, size = 0x20000, scoped, tag = 'input window, operand 0']
    #allocation3 [shape = 's32[2]{0}', space=sflag, size = 0x8, scoped, tag = 'scoped memory for tpu_custom_call.1']
    #allocation4 [shape = 's32[2]{0}', space=sflag, size = 0x8, scoped, tag = 'scoped memory for tpu_custom_call.1']
    #allocation5 [shape = 'u8[131072]{0}', space=vmem, size = 0x20000, scoped, tag = 'output window, operand 0']
    %7 = vsyncpa [#allocation3], 0
    %s8 = scalar_lea.sflag [#allocation3], 1
    %9 = vsyncpa %s8, 0
    %10 = vsyncpa [#allocation4], 0
    %s11 = scalar_lea.sflag [#allocation4], 1
    %12 = vsyncpa %s11, 0
    loop: start=0, step=1, limit=6
    $region2: #{tpu_custom_call.1} parent=1 // loop_pre_header
      _
    $region3: #{tpu_custom_call.1} parent=1 // loop_header
      %s14 = sphi 0, %s18
      %p15 = scmp.ge.s32.totalorder %s14, 6
      %s21 = sphi 0, %s33
      %s22 = sphi 0, %s29
      %s23 = sphi 0, %s21
      %s24 = sphi 0, %s22
      %s25 = sphi 0, %s23
      %s26 = sphi 0, %s24
      %s38 = sphi 0, %s40
      %s41 = sphi 0, %s38
      %s42 = sphi 0, %s41
      %s58 = sphi 0, %s42
      %s62 = sphi 0, %s62
      %s64 = sphi 0, %s62
      %s65 = sphi 0, %s64
      %s79 = sphi 0, %s65
      %s87 = sphi 0, %s89
      %s90 = sphi 0, %s87
      %s91 = sphi 0, %s90
      %s107 = sphi 0, %s91
    $region4: #{tpu_custom_call.1} parent=1 // loop_header_branch
      %17 = sbr.rel (%p15) target = $region8
    $region5: #{tpu_custom_call.1} parent=1 // loop_body
      %s19 = ssub.s32 %s14, 1
      %s20 = ssub.s32 %s14, 2
      %s27 = sadd.s32 1, %s22
      %p28 = scmp.ge.s32.totalorder %s27, 4
      %s29 = scalar_select %p28, 0, %s27
      %s30 = sadd.s32 1, %s21
      %s31 = scalar_select %p28, %s30, %s21
      %p32 = scmp.ge.s32.totalorder %s31, 1
      %s33 = scalar_select %p32, 0, %s31
      %s34 = ssub.s32 %s21, %s33
      %s35 = ssub.s32 %s22, %s29
      %s36 = sor.u32 %s34, %s35
      %p37 = scmp.eq.s32.totalorder %s36, 0
      %s39 = sadd.s32 %s38, 1
      %s40 = scalar_select %p37, %s38, %s39
      %p43 = pneg %p37
      %p44 = scmp.eq.s32.totalorder %s14, 3
      %p45 = por %p43, %p44
      %p46 = scmp.ne.s32.totalorder %s38, %s41
      %p47 = scmp.eq.s32.totalorder %s14, 0
      %p48 = por %p46, %p47
      %p49 = scmp.ne.s32.totalorder %s38, %s41
      %p50 = scmp.eq.s32.totalorder %s19, 3
      %p51 = por %p49, %p50
      %p52 = scmp.ne.s32.totalorder %s41, %s42
      %p53 = scmp.eq.s32.totalorder %s19, 0
      %p54 = por %p52, %p53
      %p55 = scmp.ne.s32.totalorder %s41, %s42
      %p56 = scmp.eq.s32.totalorder %s20, 3
      %p57 = por %p55, %p56
      %p59 = scmp.ne.s32.totalorder %s42, %s58
      %p60 = scmp.eq.s32.totalorder %s20, 0
      %p61 = por %p59, %p60
      %s63 = sadd.s32 %s62, 1
      %p66 = scmp.eq.s32.totalorder %s14, 3
      %p67 = scmp.ne.s32.totalorder %s62, %s64
      %p68 = scmp.eq.s32.totalorder %s14, 0
      %p69 = por %p67, %p68
      %p70 = scmp.ne.s32.totalorder %s62, %s64
      %p71 = scmp.eq.s32.totalorder %s19, 3
      %p72 = por %p70, %p71
      %p73 = scmp.ne.s32.totalorder %s64, %s65
      %p74 = scmp.eq.s32.totalorder %s19, 0
      %p75 = por %p73, %p74
      %p76 = scmp.ne.s32.totalorder %s64, %s65
      %p77 = scmp.eq.s32.totalorder %s20, 3
      %p78 = por %p76, %p77
      %p80 = scmp.ne.s32.totalorder %s65, %s79
      %p81 = scmp.eq.s32.totalorder %s20, 0
      %p82 = por %p80, %p81
      %s83 = ssub.s32 %s21, %s33
      %s84 = ssub.s32 %s22, %s29
      %s85 = sor.u32 %s83, %s84
      %p86 = scmp.eq.s32.totalorder %s85, 0
      %s88 = sadd.s32 %s87, 1
      %s89 = scalar_select %p86, %s87, %s88
      %p92 = pneg %p86
      %p93 = scmp.eq.s32.totalorder %s14, 3
      %p94 = por %p92, %p93
      %p95 = scmp.ne.s32.totalorder %s87, %s90
      %p96 = scmp.eq.s32.totalorder %s14, 0
      %p97 = por %p95, %p96
      %p98 = scmp.ne.s32.totalorder %s87, %s90
      %p99 = scmp.eq.s32.totalorder %s19, 3
      %p100 = por %p98, %p99
      %p101 = scmp.ne.s32.totalorder %s90, %s91
      %p102 = scmp.eq.s32.totalorder %s19, 0
      %p103 = por %p101, %p102
      %p104 = scmp.ne.s32.totalorder %s90, %s91
      %p105 = scmp.eq.s32.totalorder %s20, 3
      %p106 = por %p104, %p105
      %p108 = scmp.ne.s32.totalorder %s91, %s107
      %p109 = scmp.eq.s32.totalorder %s20, 0
      %p110 = por %p108, %p109
      %p111 = scmp.le.s32.totalorder 1, %s14
      %p112 = scmp.lt.s32.totalorder %s14, 5
      %p113 = pnand %p111, %p112
      %p114 = pneg %p113
      // Predicated region
      $region9: #{tpu_custom_call.1} parent=5 // pred_check
        _
      $region10: #{tpu_custom_call.1} parent=5 // pred_check_branch
        %116 = sbr.rel (%p113) target = $region12
      $region11: #{tpu_custom_call.1} parent=5 // pred_region
        %s117 = ssub.s32 %s14, 1
        // Predicated region
        $region13: #{tpu_custom_call.1} parent=11 // pred_check
          %p118 = pneg %p75
        $region14: #{tpu_custom_call.1} parent=11 // pred_check_branch
          %120 = sbr.rel (%p118) target = $region16
        $region15: #{tpu_custom_call.1} parent=11 // pred_region
          _
        $region16: #{tpu_custom_call.1} parent=11 // pred_fallthru
          _
      $region12: #{tpu_custom_call.1} parent=5 // pred_fallthru
        _
      %p121 = scmp.lt.s32.totalorder %s14, 4
      // Predicated region
      $region17: #{tpu_custom_call.1} parent=5 // pred_check
        %p122 = pneg %p121
      $region18: #{tpu_custom_call.1} parent=5 // pred_check_branch
        %124 = sbr.rel (%p122) target = $region20
      $region19: #{tpu_custom_call.1} parent=5 // pred_region
        // Predicated region
        $region21: #{tpu_custom_call.1} parent=19 // pred_check
          %p125 = pneg %p48
        $region22: #{tpu_custom_call.1} parent=19 // pred_check_branch
          %127 = sbr.rel (%p125) target = $region24
        $region23: #{tpu_custom_call.1} parent=19 // pred_region
          #allocation7 [shape = 'u32[6]{0}', space=smem, size = 0x18, scoped, tag = 'DMA stride descriptor']
          %s128 = sand.u32 %s38, 1
          %s129 = scalar_lea.sflag [#allocation3], %s128
          %s130 = sand.u32 %s38, 1
          %s131 = smul.addr %s130, 128
          %s132 = scalar_lea.vmem [#allocation2], %s131
          %s133 = smul.u32 2, %s21
          %s134 = smul.u32 8, %s22
          %s136 = ssub.s32 2048, 2048
          %137 = vsyncadd %s129, %s136
          %s138 = smul.addr %s133, 32
          %s139 = sadd.s32 %s134, %s138
          %s140 = smul.addr %s139, 128
          %s141 = scalar_lea.hbm %s0, %s140
          %s143 = sshll.u32 1, 14
          %s144 = sxor.u32 4294967295, %s143
          %s146 = sld [smem:[#allocation0]]
          %s147 = sadd.s32 2, %s146
          %s149 = sshll.u32 7, 26
          %s150 = sxor.u32 4294967295, %s149
          %s151 = sand.u32 0, %s150
          %s152 = sshll.u32 %s147, 26
          %s153 = sor.u32 %s151, %s152
          %s154 = sshll.u32 %s132, 4
          %s155 = int_to_ptr.vmem [resolvable:$true] %s154
          %161 = sst [smem:[#allocation7]] 4096
          %s162 = scalar_lea.smem [#allocation7], 1
          %163 = sst [smem:[%s162]] 1024
          %s164 = scalar_lea.smem [#allocation7], 2
          %165 = sst [smem:[%s164]] 8
          %s166 = scalar_lea.smem [#allocation7], 3
          %167 = sst [smem:[%s166]] 128
          %s168 = scalar_lea.smem [#allocation7], 4
          %169 = sst [smem:[%s168]] 128
          %s170 = scalar_lea.smem [#allocation7], 5
          %171 = sst [smem:[%s170]] 8
          %173 = dma.general %s141, 2048, %s155, %s129, [#allocation6], [#allocation7], %s153, 0
        $region24: #{tpu_custom_call.1} parent=19 // pred_fallthru
          _
      $region20: #{tpu_custom_call.1} parent=5 // pred_fallthru
        _
      %p174 = scmp.le.s32.totalorder 1, %s14
      %p175 = scmp.lt.s32.totalorder %s14, 5
      %p176 = pnand %p174, %p175
      %p177 = pneg %p176
      // Predicated region
      $region25: #{tpu_custom_call.1} parent=5 // pred_check
        _
      $region26: #{tpu_custom_call.1} parent=5 // pred_check_branch
        %179 = sbr.rel (%p176) target = $region28
      $region27: #{tpu_custom_call.1} parent=5 // pred_region
        %s180 = ssub.s32 %s14, 1
        %s181 = sand.u32 %s41, 1
        %s182 = scalar_lea.sflag [#allocation3], %s181
        %s183 = sand.u32 %s41, 1
        %s184 = smul.addr %s183, 128
        %s185 = scalar_lea.vmem [#allocation2], %s184
        // Predicated region
        $region29: #{tpu_custom_call.1} parent=27 // pred_check
          %p186 = pneg %p54
        $region30: #{tpu_custom_call.1} parent=27 // pred_check_branch
          %188 = sbr.rel (%p186) target = $region32
        $region31: #{tpu_custom_call.1} parent=27 // pred_region
          %189 = dma.done %s182, 2048
        $region32: #{tpu_custom_call.1} parent=27 // pred_fallthru
          _
        %s190 = sand.u32 %s41, 1
        %s191 = scalar_lea.sflag [#allocation3], %s190
        %s192 = sand.u32 %s41, 1
        %s193 = smul.addr %s192, 128
        %s194 = scalar_lea.vmem [#allocation2], %s193
        %p195 = pneg %p54
        %p196 = pneg %p51
        %p197 = pneg %p75
        %p198 = pneg %p72
        %p199 = pneg %p103
        %p200 = pneg %p100
        %s201 = sand.u32 %s90, 1
        %s202 = scalar_lea.sflag [#allocation4], %s201
        %s203 = sand.u32 %s90, 1
        %s204 = smul.addr %s203, 128
        %s205 = scalar_lea.vmem [#allocation5], %s204
        %s206 = smul.u32 2, %s23
        %s207 = smul.u32 8, %s24
        %s208 = smul.u32 2, %s23
        %s209 = smul.u32 8, %s24
        %v210 = vlaneseq
        %v211 = vshrl.u32 %v210, 7
        %v212 = vadd.s32 %v211, 8
        %v213 = vadd.s32 %v211, 16
        %v214 = vadd.s32 %v211, 24
        %v215 = vadd.s32 %v211, 32
        %v216 = vadd.s32 %v211, 40
        %v217 = vadd.s32 %v211, 48
        %v218 = vadd.s32 %v211, 56
        %v219 = vcvt.s32.f32 %v211
        %v220 = vcvt.s32.f32 %v212
        %v221 = vcvt.s32.f32 %v213
        %v222 = vcvt.s32.f32 %v214
        %v223 = vcvt.s32.f32 %v215
        %v224 = vcvt.s32.f32 %v216
        %v225 = vcvt.s32.f32 %v217
        %v226 = vcvt.s32.f32 %v218
        %s227 = smul.u32 %s24, 64
        %s228 = scvt.s32.f32 %s227
        %v229 = vstv %s228
        %v230 = vadd.f32 %v229, %v219
        %v231 = vadd.f32 %v229, %v220
        %v232 = vadd.f32 %v229, %v221
        %v233 = vadd.f32 %v229, %v222
        %v234 = vadd.f32 %v229, %v223
        %v235 = vadd.f32 %v229, %v224
        %v236 = vadd.f32 %v229, %v225
        %v237 = vadd.f32 %v229, %v226
        %v238 = vrcp.pop 1000.0
        %v239 = vmul.f32 %v230, %v238
        %v240 = vmul.f32 %v231, %v238
        %v241 = vmul.f32 %v232, %v238
        %v242 = vmul.f32 %v233, %v238
        %v243 = vmul.f32 %v234, %v238
        %v244 = vmul.f32 %v235, %v238
        %v245 = vmul.f32 %v236, %v238
        %v246 = vmul.f32 %v237, %v238
        %v247 = vfloor.f32 %v239
        %v248 = vfloor.f32 %v240
        %v249 = vfloor.f32 %v241
        %v250 = vfloor.f32 %v242
        %v251 = vfloor.f32 %v243
        %v252 = vfloor.f32 %v244
        %v253 = vfloor.f32 %v245
        %v254 = vfloor.f32 %v246
        %v255 = vmul.f32 %v247, 1000.0
        %v256 = vmul.f32 %v248, 1000.0
        %v257 = vmul.f32 %v249, 1000.0
        %v258 = vmul.f32 %v250, 1000.0
        %v259 = vmul.f32 %v251, 1000.0
        %v260 = vmul.f32 %v252, 1000.0
        %v261 = vmul.f32 %v253, 1000.0
        %v262 = vmul.f32 %v254, 1000.0
        %v263 = vsub.f32 %v230, %v255
        %v264 = vsub.f32 %v231, %v256
        %v265 = vsub.f32 %v232, %v257
        %v266 = vsub.f32 %v233, %v258
        %v267 = vsub.f32 %v234, %v259
        %v268 = vsub.f32 %v235, %v260
        %v269 = vsub.f32 %v236, %v261
        %v270 = vsub.f32 %v237, %v262
        %v271 = vld [vmem:[%s1] sm:$0x1]
        %v272 = vld [vmem:[%s1 + $0x1] sm:$0x1]
        %v273 = vld [vmem:[%s1 + $0x2] sm:$0x1]
        %v275 = vlaneseq
        %v276 = vshrl.u32 %v275, 7
        %v277 = vsub.s32 0, %v276
        %v278 = vrot.slane %v271, %v277
        %v280 = vmul.f32 %v263, %v278
        %v281 = vmul.f32 %v264, %v278
        %v282 = vmul.f32 %v265, %v278
        %v283 = vmul.f32 %v266, %v278
        %v284 = vmul.f32 %v267, %v278
        %v285 = vmul.f32 %v268, %v278
        %v286 = vmul.f32 %v269, %v278
        %v287 = vmul.f32 %v270, %v278
        %v289 = vlaneseq
        %v290 = vshrl.u32 %v289, 7
        %v291 = vsub.s32 0, %v290
        %v292 = vrot.slane %v272, %v291
        %v294 = vmul.f32 %v247, %v292
        %v295 = vmul.f32 %v248, %v292
        %v296 = vmul.f32 %v249, %v292
        %v297 = vmul.f32 %v250, %v292
        %v298 = vmul.f32 %v251, %v292
        %v299 = vmul.f32 %v252, %v292
        %v300 = vmul.f32 %v253, %v292
        %v301 = vmul.f32 %v254, %v292
        %v302 = vadd.f32 %v280, %v294
        %v303 = vadd.f32 %v281, %v295
        %v304 = vadd.f32 %v282, %v296
        %v305 = vadd.f32 %v283, %v297
        %v306 = vadd.f32 %v284, %v298
        %v307 = vadd.f32 %v285, %v299
        %v308 = vadd.f32 %v286, %v300
        %v309 = vadd.f32 %v287, %v301
        %v311 = vlaneseq
        %v312 = vshrl.u32 %v311, 7
        %v313 = vsub.s32 0, %v312
        %v314 = vrot.slane %v273, %v313
        %v316 = vadd.f32 %v302, %v314
        %v317 = vadd.f32 %v303, %v314
        %v318 = vadd.f32 %v304, %v314
        %v319 = vadd.f32 %v305, %v314
        %v320 = vadd.f32 %v306, %v314
        %v321 = vadd.f32 %v307, %v314
        %v322 = vadd.f32 %v308, %v314
        %v323 = vadd.f32 %v309, %v314
        %v324 = vand.u32 2147483647, %v316
        %vm325 = vcmp.le.f32.partialorder %v324, 0.7853982
        %vm326 = vcmp.lt.s32.totalorder %v316, 0
        %v327 = vand.u32 %v316, 2139095040
        %v328 = vshrl.u32 %v327, 23
        %v329 = vsub.s32 %v328, 127
        %v330 = vand.u32 2147483647, %v316
        %v331 = vand.u32 %v330, 8388607
        %v332 = vor.u32 %v331, 8388608
        %v333 = vsub.s32 0, %v332
        %v334 = vadd.s32 %v329, 1
        %vm335 = vcmp.gt.s32.totalorder %v334, 0
        %v336 = vsel %vm335, %v334, 0
        %v337 = vshrl.u32 %v336, 5
        %v338 = vand.u32 %v336, 31
        %v339 = vsub.s32 32, %v338
        %v340 = vshrl.u32 683565275, %v339
        %v341 = vshll.u32 683565275, %v338
        %v342 = vshrl.u32 2475754826, %v339
        %v343 = vor.u32 %v341, %v342
        %v344 = vshll.u32 2475754826, %v338
        %v345 = vshrl.u32 2131351028, %v339
        %v346 = vor.u32 %v344, %v345
        %v347 = vshll.u32 2131351028, %v338
        %v348 = vshrl.u32 2102212464, %v339
        %v349 = vor.u32 %v347, %v348
        %v350 = vshll.u32 2102212464, %v338
        %v351 = vshrl.u32 920167782, %v339
        %v352 = vor.u32 %v350, %v351
        %v353 = vshll.u32 920167782, %v338
        %v354 = vshrl.u32 1326507024, %v339
        %v355 = vor.u32 %v353, %v354
        %vm356 = vcmp.lt.s32.totalorder %v337, 1
        %vm357 = vcmp.lt.s32.totalorder %v337, 2
        %vm358 = vcmp.lt.s32.totalorder %v337, 3
        %vm359 = vcmp.lt.s32.totalorder %v337, 4
        %v360 = vsel %vm356, %v340, %v343
        %v361 = vsel %vm359, %v349, 2102212464
        %v362 = vsel %vm358, %v346, %v361
        %v363 = vsel %vm357, %v360, %v362
        %v364 = vsel %vm356, %v343, %v346
        %v365 = vsel %vm359, %v352, 920167782
        %v366 = vsel %vm358, %v349, %v365
        %v367 = vsel %vm357, %v364, %v366
        %v368 = vsel %vm356, %v346, %v349
        %v369 = vsel %vm359, %v355, 1326507024
        %v370 = vsel %vm358, %v352, %v369
        %v371 = vsel %vm357, %v368, %v370
        %v372 = vshll.u32 %v332, 8
        %v373 = vmul.u32.u64.compose %v372, %v371
        %v374 = vextract.low.u32 %v373
        %v375 = vextract.high.u32 %v373
        %v376 = vmul.u32.u64.compose %v372, %v367
        %v377 = vextract.low.u32 %v376
        %v378 = vextract.high.u32 %v376
        %v379 = vmul.u32 %v372, %v363
        %v380 = vadd.s32 %v375, %v377
        %vm381 = vc.u32 %v375, %v377
        %v382 = vadd.s32 %v378, 1
        %v383 = vsel %vm381, %v382, %v378
        %v384 = vadd.s32 %v379, %v383
        %v385 = vadd.s32 %v384, 536870912
        %v386 = vshrl.u32 %v385, 30
        %v387 = vshll.u32 %v386, 30
        %v388 = vsub.s32 %v384, %v387
        %vm389 = vcmp.lt.s32.totalorder %v388, 0
        %v390 = vsub.s32 0, %v388
        %v391 = vsel %vm389, %v390, %v388
        %v392 = vclz %v391
        %v393 = vsub.s32 %v392, 2
        %vm394 = vcmp.gt.s32.totalorder 0, %v393
        %v395 = vsel %vm394, 0, %v393
        %v396 = vsub.s32 32, %v395
        %v397 = vshll.u32 %v388, %v395
        %v398 = vshrl.u32 %v380, %v396
        %v399 = vor.u32 %v397, %v398
        %v400 = vsub.s32 4294967266, %v395
        %v401 = vadd.s32 %v400, 127
        %v402 = vshll.u32 %v401, 23
        %v403 = vor.u32 4788187, %v402
        %v404 = vand.u32 2147483647, %v403
        %v406 = vcvt.s32.f32 %v399
        %v407 = vmul.f32 %v406, %v404
        %v408 = vxor.u32 %v407, 2147483648
        %v409 = vsel %vm326, %v408, %v407
        %v410 = vsub.s32 4, %v386
        %v411 = vsel %vm326, %v410, %v386
        %v412 = vsel %vm325, %v316, %v409
        %v413 = vsel %vm325, 0, %v411
        %v414 = vcosq.f32.pop %v412
        %v415 = vsinq.f32.pop %v412
        %vm416 = vweird.f32 %v316
        %v417 = vadd.s32 %v413, 3
        %v418 = vand.u32 %v417, 3
        %vm419 = vcmp.lt.s32.totalorder %v418, 2
        %vm420 = vcmp.eq.s32.totalorder %v418, 0
        %v421 = vxor.u32 %v415, 2147483648
        %v422 = vsel %vm420, %v414, %v421
        %vm423 = vcmp.eq.s32.totalorder %v418, 2
        %v424 = vxor.u32 %v414, 2147483648
        %v425 = vsel %vm423, %v424, %v415
        %v426 = vsel %vm419, %v422, %v425
        %v427 = vsel %vm416, nan, %v426
        %v428 = vand.u32 2147483647, %v317
        %vm429 = vcmp.le.f32.partialorder %v428, 0.7853982
        %vm430 = vcmp.lt.s32.totalorder %v317, 0
        %v431 = vand.u32 %v317, 2139095040
        %v432 = vshrl.u32 %v431, 23
        %v433 = vsub.s32 %v432, 127
        %v434 = vand.u32 2147483647, %v317
        %v435 = vand.u32 %v434, 8388607
        %v436 = vor.u32 %v435, 8388608
        %v437 = vsub.s32 0, %v436
        %v438 = vadd.s32 %v433, 1
        %vm439 = vcmp.gt.s32.totalorder %v438, 0
        %v440 = vsel %vm439, %v438, 0
        %v441 = vshrl.u32 %v440, 5
        %v442 = vand.u32 %v440, 31
        %v443 = vsub.s32 32, %v442
        %v444 = vshrl.u32 683565275, %v443
        %v445 = vshll.u32 683565275, %v442
        %v446 = vshrl.u32 2475754826, %v443
        %v447 = vor.u32 %v445, %v446
        %v448 = vshll.u32 2475754826, %v442
        %v449 = vshrl.u32 2131351028, %v443
        %v450 = vor.u32 %v448, %v449
        %v451 = vshll.u32 2131351028, %v442
        %v452 = vshrl.u32 2102212464, %v443
        %v453 = vor.u32 %v451, %v452
        %v454 = vshll.u32 2102212464, %v442
        %v455 = vshrl.u32 920167782, %v443
        %v456 = vor.u32 %v454, %v455
        %v457 = vshll.u32 920167782, %v442
        %v458 = vshrl.u32 1326507024, %v443
        %v459 = vor.u32 %v457, %v458
        %vm460 = vcmp.lt.s32.totalorder %v441, 1
        %vm461 = vcmp.lt.s32.totalorder %v441, 2
        %vm462 = vcmp.lt.s32.totalorder %v441, 3
        %vm463 = vcmp.lt.s32.totalorder %v441, 4
        %v464 = vsel %vm460, %v444, %v447
        %v465 = vsel %vm463, %v453, 2102212464
        %v466 = vsel %vm462, %v450, %v465
        %v467 = vsel %vm461, %v464, %v466
        %v468 = vsel %vm460, %v447, %v450
        %v469 = vsel %vm463, %v456, 920167782
        %v470 = vsel %vm462, %v453, %v469
        %v471 = vsel %vm461, %v468, %v470
        %v472 = vsel %vm460, %v450, %v453
        %v473 = vsel %vm463, %v459, 1326507024
        %v474 = vsel %vm462, %v456, %v473
        %v475 = vsel %vm461, %v472, %v474
        %v476 = vshll.u32 %v436, 8
        %v477 = vmul.u32.u64.compose %v476, %v475
        %v478 = vextract.low.u32 %v477
        %v479 = vextract.high.u32 %v477
        %v480 = vmul.u32.u64.compose %v476, %v471
        %v481 = vextract.low.u32 %v480
        %v482 = vextract.high.u32 %v480
        %v483 = vmul.u32 %v476, %v467
        %v484 = vadd.s32 %v479, %v481
        %vm485 = vc.u32 %v479, %v481
        %v486 = vadd.s32 %v482, 1
        %v487 = vsel %vm485, %v486, %v482
        %v488 = vadd.s32 %v483, %v487
        %v489 = vadd.s32 %v488, 536870912
        %v490 = vshrl.u32 %v489, 30
        %v491 = vshll.u32 %v490, 30
        %v492 = vsub.s32 %v488, %v491
        %vm493 = vcmp.lt.s32.totalorder %v492, 0
        %v494 = vsub.s32 0, %v492
        %v495 = vsel %vm493, %v494, %v492
        %v496 = vclz %v495
        %v497 = vsub.s32 %v496, 2
        %vm498 = vcmp.gt.s32.totalorder 0, %v497
        %v499 = vsel %vm498, 0, %v497
        %v500 = vsub.s32 32, %v499
        %v501 = vshll.u32 %v492, %v499
        %v502 = vshrl.u32 %v484, %v500
        %v503 = vor.u32 %v501, %v502
        %v504 = vsub.s32 4294967266, %v499
        %v505 = vadd.s32 %v504, 127
        %v506 = vshll.u32 %v505, 23
        %v507 = vor.u32 4788187, %v506
        %v508 = vand.u32 2147483647, %v507
        %v510 = vcvt.s32.f32 %v503
        %v511 = vmul.f32 %v510, %v508
        %v512 = vxor.u32 %v511, 2147483648
        %v513 = vsel %vm430, %v512, %v511
        %v514 = vsub.s32 4, %v490
        %v515 = vsel %vm430, %v514, %v490
        %v516 = vsel %vm429, %v317, %v513
        %v517 = vsel %vm429, 0, %v515
        %v518 = vcosq.f32.pop %v516
        %v519 = vsinq.f32.pop %v516
        %vm520 = vweird.f32 %v317
        %v521 = vadd.s32 %v517, 3
        %v522 = vand.u32 %v521, 3
        %vm523 = vcmp.lt.s32.totalorder %v522, 2
        %vm524 = vcmp.eq.s32.totalorder %v522, 0
        %v525 = vxor.u32 %v519, 2147483648
        %v526 = vsel %vm524, %v518, %v525
        %vm527 = vcmp.eq.s32.totalorder %v522, 2
        %v528 = vxor.u32 %v518, 2147483648
        %v529 = vsel %vm527, %v528, %v519
        %v530 = vsel %vm523, %v526, %v529
        %v531 = vsel %vm520, nan, %v530
        %v532 = vand.u32 2147483647, %v318
        %vm533 = vcmp.le.f32.partialorder %v532, 0.7853982
        %vm534 = vcmp.lt.s32.totalorder %v318, 0
        %v535 = vand.u32 %v318, 2139095040
        %v536 = vshrl.u32 %v535, 23
        %v537 = vsub.s32 %v536, 127
        %v538 = vand.u32 2147483647, %v318
        %v539 = vand.u32 %v538, 8388607
        %v540 = vor.u32 %v539, 8388608
        %v541 = vsub.s32 0, %v540
        %v542 = vadd.s32 %v537, 1
        %vm543 = vcmp.gt.s32.totalorder %v542, 0
        %v544 = vsel %vm543, %v542, 0
        %v545 = vshrl.u32 %v544, 5
        %v546 = vand.u32 %v544, 31
        %v547 = vsub.s32 32, %v546
        %v548 = vshrl.u32 683565275, %v547
        %v549 = vshll.u32 683565275, %v546
        %v550 = vshrl.u32 2475754826, %v547
        %v551 = vor.u32 %v549, %v550
        %v552 = vshll.u32 2475754826, %v546
        %v553 = vshrl.u32 2131351028, %v547
        %v554 = vor.u32 %v552, %v553
        %v555 = vshll.u32 2131351028, %v546
        %v556 = vshrl.u32 2102212464, %v547
        %v557 = vor.u32 %v555, %v556
        %v558 = vshll.u32 2102212464, %v546
        %v559 = vshrl.u32 920167782, %v547
        %v560 = vor.u32 %v558, %v559
        %v561 = vshll.u32 920167782, %v546
        %v562 = vshrl.u32 1326507024, %v547
        %v563 = vor.u32 %v561, %v562
        %vm564 = vcmp.lt.s32.totalorder %v545, 1
        %vm565 = vcmp.lt.s32.totalorder %v545, 2
        %vm566 = vcmp.lt.s32.totalorder %v545, 3
        %vm567 = vcmp.lt.s32.totalorder %v545, 4
        %v568 = vsel %vm564, %v548, %v551
        %v569 = vsel %vm567, %v557, 2102212464
        %v570 = vsel %vm566, %v554, %v569
        %v571 = vsel %vm565, %v568, %v570
        %v572 = vsel %vm564, %v551, %v554
        %v573 = vsel %vm567, %v560, 920167782
        %v574 = vsel %vm566, %v557, %v573
        %v575 = vsel %vm565, %v572, %v574
        %v576 = vsel %vm564, %v554, %v557
        %v577 = vsel %vm567, %v563, 1326507024
        %v578 = vsel %vm566, %v560, %v577
        %v579 = vsel %vm565, %v576, %v578
        %v580 = vshll.u32 %v540, 8
        %v581 = vmul.u32.u64.compose %v580, %v579
        %v582 = vextract.low.u32 %v581
        %v583 = vextract.high.u32 %v581
        %v584 = vmul.u32.u64.compose %v580, %v575
        %v585 = vextract.low.u32 %v584
        %v586 = vextract.high.u32 %v584
        %v587 = vmul.u32 %v580, %v571
        %v588 = vadd.s32 %v583, %v585
        %vm589 = vc.u32 %v583, %v585
        %v590 = vadd.s32 %v586, 1
        %v591 = vsel %vm589, %v590, %v586
        %v592 = vadd.s32 %v587, %v591
        %v593 = vadd.s32 %v592, 536870912
        %v594 = vshrl.u32 %v593, 30
        %v595 = vshll.u32 %v594, 30
        %v596 = vsub.s32 %v592, %v595
        %vm597 = vcmp.lt.s32.totalorder %v596, 0
        %v598 = vsub.s32 0, %v596
        %v599 = vsel %vm597, %v598, %v596
        %v600 = vclz %v599
        %v601 = vsub.s32 %v600, 2
        %vm602 = vcmp.gt.s32.totalorder 0, %v601
        %v603 = vsel %vm602, 0, %v601
        %v604 = vsub.s32 32, %v603
        %v605 = vshll.u32 %v596, %v603
        %v606 = vshrl.u32 %v588, %v604
        %v607 = vor.u32 %v605, %v606
        %v608 = vsub.s32 4294967266, %v603
        %v609 = vadd.s32 %v608, 127
        %v610 = vshll.u32 %v609, 23
        %v611 = vor.u32 4788187, %v610
        %v612 = vand.u32 2147483647, %v611
        %v614 = vcvt.s32.f32 %v607
        %v615 = vmul.f32 %v614, %v612
        %v616 = vxor.u32 %v615, 2147483648
        %v617 = vsel %vm534, %v616, %v615
        %v618 = vsub.s32 4, %v594
        %v619 = vsel %vm534, %v618, %v594
        %v620 = vsel %vm533, %v318, %v617
        %v621 = vsel %vm533, 0, %v619
        %v622 = vcosq.f32.pop %v620
        %v623 = vsinq.f32.pop %v620
        %vm624 = vweird.f32 %v318
        %v625 = vadd.s32 %v621, 3
        %v626 = vand.u32 %v625, 3
        %vm627 = vcmp.lt.s32.totalorder %v626, 2
        %vm628 = vcmp.eq.s32.totalorder %v626, 0
        %v629 = vxor.u32 %v623, 2147483648
        %v630 = vsel %vm628, %v622, %v629
        %vm631 = vcmp.eq.s32.totalorder %v626, 2
        %v632 = vxor.u32 %v622, 2147483648
        %v633 = vsel %vm631, %v632, %v623
        %v634 = vsel %vm627, %v630, %v633
        %v635 = vsel %vm624, nan, %v634
        %v636 = vand.u32 2147483647, %v319
        %vm637 = vcmp.le.f32.partialorder %v636, 0.7853982
        %vm638 = vcmp.lt.s32.totalorder %v319, 0
        %v639 = vand.u32 %v319, 2139095040
        %v640 = vshrl.u32 %v639, 23
        %v641 = vsub.s32 %v640, 127
        %v642 = vand.u32 2147483647, %v319
        %v643 = vand.u32 %v642, 8388607
        %v644 = vor.u32 %v643, 8388608
        %v645 = vsub.s32 0, %v644
        %v646 = vadd.s32 %v641, 1
        %vm647 = vcmp.gt.s32.totalorder %v646, 0
        %v648 = vsel %vm647, %v646, 0
        %v649 = vshrl.u32 %v648, 5
        %v650 = vand.u32 %v648, 31
        %v651 = vsub.s32 32, %v650
        %v652 = vshrl.u32 683565275, %v651
        %v653 = vshll.u32 683565275, %v650
        %v654 = vshrl.u32 2475754826, %v651
        %v655 = vor.u32 %v653, %v654
        %v656 = vshll.u32 2475754826, %v650
        %v657 = vshrl.u32 2131351028, %v651
        %v658 = vor.u32 %v656, %v657
        %v659 = vshll.u32 2131351028, %v650
        %v660 = vshrl.u32 2102212464, %v651
        %v661 = vor.u32 %v659, %v660
        %v662 = vshll.u32 2102212464, %v650
        %v663 = vshrl.u32 920167782, %v651
        %v664 = vor.u32 %v662, %v663
        %v665 = vshll.u32 920167782, %v650
        %v666 = vshrl.u32 1326507024, %v651
        %v667 = vor.u32 %v665, %v666
        %vm668 = vcmp.lt.s32.totalorder %v649, 1
        %vm669 = vcmp.lt.s32.totalorder %v649, 2
        %vm670 = vcmp.lt.s32.totalorder %v649, 3
        %vm671 = vcmp.lt.s32.totalorder %v649, 4
        %v672 = vsel %vm668, %v652, %v655
        %v673 = vsel %vm671, %v661, 2102212464
        %v674 = vsel %vm670, %v658, %v673
        %v675 = vsel %vm669, %v672, %v674
        %v676 = vsel %vm668, %v655, %v658
        %v677 = vsel %vm671, %v664, 920167782
        %v678 = vsel %vm670, %v661, %v677
        %v679 = vsel %vm669, %v676, %v678
        %v680 = vsel %vm668, %v658, %v661
        %v681 = vsel %vm671, %v667, 1326507024
        %v682 = vsel %vm670, %v664, %v681
        %v683 = vsel %vm669, %v680, %v682
        %v684 = vshll.u32 %v644, 8
        %v685 = vmul.u32.u64.compose %v684, %v683
        %v686 = vextract.low.u32 %v685
        %v687 = vextract.high.u32 %v685
        %v688 = vmul.u32.u64.compose %v684, %v679
        %v689 = vextract.low.u32 %v688
        %v690 = vextract.high.u32 %v688
        %v691 = vmul.u32 %v684, %v675
        %v692 = vadd.s32 %v687, %v689
        %vm693 = vc.u32 %v687, %v689
        %v694 = vadd.s32 %v690, 1
        %v695 = vsel %vm693, %v694, %v690
        %v696 = vadd.s32 %v691, %v695
        %v697 = vadd.s32 %v696, 536870912
        %v698 = vshrl.u32 %v697, 30
        %v699 = vshll.u32 %v698, 30
        %v700 = vsub.s32 %v696, %v699
        %vm701 = vcmp.lt.s32.totalorder %v700, 0
        %v702 = vsub.s32 0, %v700
        %v703 = vsel %vm701, %v702, %v700
        %v704 = vclz %v703
        %v705 = vsub.s32 %v704, 2
        %vm706 = vcmp.gt.s32.totalorder 0, %v705
        %v707 = vsel %vm706, 0, %v705
        %v708 = vsub.s32 32, %v707
        %v709 = vshll.u32 %v700, %v707
        %v710 = vshrl.u32 %v692, %v708
        %v711 = vor.u32 %v709, %v710
        %v712 = vsub.s32 4294967266, %v707
        %v713 = vadd.s32 %v712, 127
        %v714 = vshll.u32 %v713, 23
        %v715 = vor.u32 4788187, %v714
        %v716 = vand.u32 2147483647, %v715
        %v718 = vcvt.s32.f32 %v711
        %v719 = vmul.f32 %v718, %v716
        %v720 = vxor.u32 %v719, 2147483648
        %v721 = vsel %vm638, %v720, %v719
        %v722 = vsub.s32 4, %v698
        %v723 = vsel %vm638, %v722, %v698
        %v724 = vsel %vm637, %v319, %v721
        %v725 = vsel %vm637, 0, %v723
        %v726 = vcosq.f32.pop %v724
        %v727 = vsinq.f32.pop %v724
        %vm728 = vweird.f32 %v319
        %v729 = vadd.s32 %v725, 3
        %v730 = vand.u32 %v729, 3
        %vm731 = vcmp.lt.s32.totalorder %v730, 2
        %vm732 = vcmp.eq.s32.totalorder %v730, 0
        %v733 = vxor.u32 %v727, 2147483648
        %v734 = vsel %vm732, %v726, %v733
        %vm735 = vcmp.eq.s32.totalorder %v730, 2
        %v736 = vxor.u32 %v726, 2147483648
        %v737 = vsel %vm735, %v736, %v727
        %v738 = vsel %vm731, %v734, %v737
        %v739 = vsel %vm728, nan, %v738
        %v740 = vand.u32 2147483647, %v320
        %vm741 = vcmp.le.f32.partialorder %v740, 0.7853982
        %vm742 = vcmp.lt.s32.totalorder %v320, 0
        %v743 = vand.u32 %v320, 2139095040
        %v744 = vshrl.u32 %v743, 23
        %v745 = vsub.s32 %v744, 127
        %v746 = vand.u32 2147483647, %v320
        %v747 = vand.u32 %v746, 8388607
        %v748 = vor.u32 %v747, 8388608
        %v749 = vsub.s32 0, %v748
        %v750 = vadd.s32 %v745, 1
        %vm751 = vcmp.gt.s32.totalorder %v750, 0
        %v752 = vsel %vm751, %v750, 0
        %v753 = vshrl.u32 %v752, 5
        %v754 = vand.u32 %v752, 31
        %v755 = vsub.s32 32, %v754
        %v756 = vshrl.u32 683565275, %v755
        %v757 = vshll.u32 683565275, %v754
        %v758 = vshrl.u32 2475754826, %v755
        %v759 = vor.u32 %v757, %v758
        %v760 = vshll.u32 2475754826, %v754
        %v761 = vshrl.u32 2131351028, %v755
        %v762 = vor.u32 %v760, %v761
        %v763 = vshll.u32 2131351028, %v754
        %v764 = vshrl.u32 2102212464, %v755
        %v765 = vor.u32 %v763, %v764
        %v766 = vshll.u32 2102212464, %v754
        %v767 = vshrl.u32 920167782, %v755
        %v768 = vor.u32 %v766, %v767
        %v769 = vshll.u32 920167782, %v754
        %v770 = vshrl.u32 1326507024, %v755
        %v771 = vor.u32 %v769, %v770
        %vm772 = vcmp.lt.s32.totalorder %v753, 1
        %vm773 = vcmp.lt.s32.totalorder %v753, 2
        %vm774 = vcmp.lt.s32.totalorder %v753, 3
        %vm775 = vcmp.lt.s32.totalorder %v753, 4
        %v776 = vsel %vm772, %v756, %v759
        %v777 = vsel %vm775, %v765, 2102212464
        %v778 = vsel %vm774, %v762, %v777
        %v779 = vsel %vm773, %v776, %v778
        %v780 = vsel %vm772, %v759, %v762
        %v781 = vsel %vm775, %v768, 920167782
        %v782 = vsel %vm774, %v765, %v781
        %v783 = vsel %vm773, %v780, %v782
        %v784 = vsel %vm772, %v762, %v765
        %v785 = vsel %vm775, %v771, 1326507024
        %v786 = vsel %vm774, %v768, %v785
        %v787 = vsel %vm773, %v784, %v786
        %v788 = vshll.u32 %v748, 8
        %v789 = vmul.u32.u64.compose %v788, %v787
        %v790 = vextract.low.u32 %v789
        %v791 = vextract.high.u32 %v789
        %v792 = vmul.u32.u64.compose %v788, %v783
        %v793 = vextract.low.u32 %v792
        %v794 = vextract.high.u32 %v792
        %v795 = vmul.u32 %v788, %v779
        %v796 = vadd.s32 %v791, %v793
        %vm797 = vc.u32 %v791, %v793
        %v798 = vadd.s32 %v794, 1
        %v799 = vsel %vm797, %v798, %v794
        %v800 = vadd.s32 %v795, %v799
        %v801 = vadd.s32 %v800, 536870912
        %v802 = vshrl.u32 %v801, 30
        %v803 = vshll.u32 %v802, 30
        %v804 = vsub.s32 %v800, %v803
        %vm805 = vcmp.lt.s32.totalorder %v804, 0
        %v806 = vsub.s32 0, %v804
        %v807 = vsel %vm805, %v806, %v804
        %v808 = vclz %v807
        %v809 = vsub.s32 %v808, 2
        %vm810 = vcmp.gt.s32.totalorder 0, %v809
        %v811 = vsel %vm810, 0, %v809
        %v812 = vsub.s32 32, %v811
        %v813 = vshll.u32 %v804, %v811
        %v814 = vshrl.u32 %v796, %v812
        %v815 = vor.u32 %v813, %v814
        %v816 = vsub.s32 4294967266, %v811
        %v817 = vadd.s32 %v816, 127
        %v818 = vshll.u32 %v817, 23
        %v819 = vor.u32 4788187, %v818
        %v820 = vand.u32 2147483647, %v819
        %v822 = vcvt.s32.f32 %v815
        %v823 = vmul.f32 %v822, %v820
        %v824 = vxor.u32 %v823, 2147483648
        %v825 = vsel %vm742, %v824, %v823
        %v826 = vsub.s32 4, %v802
        %v827 = vsel %vm742, %v826, %v802
        %v828 = vsel %vm741, %v320, %v825
        %v829 = vsel %vm741, 0, %v827
        %v830 = vcosq.f32.pop %v828
        %v831 = vsinq.f32.pop %v828
        %vm832 = vweird.f32 %v320
        %v833 = vadd.s32 %v829, 3
        %v834 = vand.u32 %v833, 3
        %vm835 = vcmp.lt.s32.totalorder %v834, 2
        %vm836 = vcmp.eq.s32.totalorder %v834, 0
        %v837 = vxor.u32 %v831, 2147483648
        %v838 = vsel %vm836, %v830, %v837
        %vm839 = vcmp.eq.s32.totalorder %v834, 2
        %v840 = vxor.u32 %v830, 2147483648
        %v841 = vsel %vm839, %v840, %v831
        %v842 = vsel %vm835, %v838, %v841
        %v843 = vsel %vm832, nan, %v842
        %v844 = vand.u32 2147483647, %v321
        %vm845 = vcmp.le.f32.partialorder %v844, 0.7853982
        %vm846 = vcmp.lt.s32.totalorder %v321, 0
        %v847 = vand.u32 %v321, 2139095040
        %v848 = vshrl.u32 %v847, 23
        %v849 = vsub.s32 %v848, 127
        %v850 = vand.u32 2147483647, %v321
        %v851 = vand.u32 %v850, 8388607
        %v852 = vor.u32 %v851, 8388608
        %v853 = vsub.s32 0, %v852
        %v854 = vadd.s32 %v849, 1
        %vm855 = vcmp.gt.s32.totalorder %v854, 0
        %v856 = vsel %vm855, %v854, 0
        %v857 = vshrl.u32 %v856, 5
        %v858 = vand.u32 %v856, 31
        %v859 = vsub.s32 32, %v858
        %v860 = vshrl.u32 683565275, %v859
        %v861 = vshll.u32 683565275, %v858
        %v862 = vshrl.u32 2475754826, %v859
        %v863 = vor.u32 %v861, %v862
        %v864 = vshll.u32 2475754826, %v858
        %v865 = vshrl.u32 2131351028, %v859
        %v866 = vor.u32 %v864, %v865
        %v867 = vshll.u32 2131351028, %v858
        %v868 = vshrl.u32 2102212464, %v859
        %v869 = vor.u32 %v867, %v868
        %v870 = vshll.u32 2102212464, %v858
        %v871 = vshrl.u32 920167782, %v859
        %v872 = vor.u32 %v870, %v871
        %v873 = vshll.u32 920167782, %v858
        %v874 = vshrl.u32 1326507024, %v859
        %v875 = vor.u32 %v873, %v874
        %vm876 = vcmp.lt.s32.totalorder %v857, 1
        %vm877 = vcmp.lt.s32.totalorder %v857, 2
        %vm878 = vcmp.lt.s32.totalorder %v857, 3
        %vm879 = vcmp.lt.s32.totalorder %v857, 4
        %v880 = vsel %vm876, %v860, %v863
        %v881 = vsel %vm879, %v869, 2102212464
        %v882 = vsel %vm878, %v866, %v881
        %v883 = vsel %vm877, %v880, %v882
        %v884 = vsel %vm876, %v863, %v866
        %v885 = vsel %vm879, %v872, 920167782
        %v886 = vsel %vm878, %v869, %v885
        %v887 = vsel %vm877, %v884, %v886
        %v888 = vsel %vm876, %v866, %v869
        %v889 = vsel %vm879, %v875, 1326507024
        %v890 = vsel %vm878, %v872, %v889
        %v891 = vsel %vm877, %v888, %v890
        %v892 = vshll.u32 %v852, 8
        %v893 = vmul.u32.u64.compose %v892, %v891
        %v894 = vextract.low.u32 %v893
        %v895 = vextract.high.u32 %v893
        %v896 = vmul.u32.u64.compose %v892, %v887
        %v897 = vextract.low.u32 %v896
        %v898 = vextract.high.u32 %v896
        %v899 = vmul.u32 %v892, %v883
        %v900 = vadd.s32 %v895, %v897
        %vm901 = vc.u32 %v895, %v897
        %v902 = vadd.s32 %v898, 1
        %v903 = vsel %vm901, %v902, %v898
        %v904 = vadd.s32 %v899, %v903
        %v905 = vadd.s32 %v904, 536870912
        %v906 = vshrl.u32 %v905, 30
        %v907 = vshll.u32 %v906, 30
        %v908 = vsub.s32 %v904, %v907
        %vm909 = vcmp.lt.s32.totalorder %v908, 0
        %v910 = vsub.s32 0, %v908
        %v911 = vsel %vm909, %v910, %v908
        %v912 = vclz %v911
        %v913 = vsub.s32 %v912, 2
        %vm914 = vcmp.gt.s32.totalorder 0, %v913
        %v915 = vsel %vm914, 0, %v913
        %v916 = vsub.s32 32, %v915
        %v917 = vshll.u32 %v908, %v915
        %v918 = vshrl.u32 %v900, %v916
        %v919 = vor.u32 %v917, %v918
        %v920 = vsub.s32 4294967266, %v915
        %v921 = vadd.s32 %v920, 127
        %v922 = vshll.u32 %v921, 23
        %v923 = vor.u32 4788187, %v922
        %v924 = vand.u32 2147483647, %v923
        %v926 = vcvt.s32.f32 %v919
        %v927 = vmul.f32 %v926, %v924
        %v928 = vxor.u32 %v927, 2147483648
        %v929 = vsel %vm846, %v928, %v927
        %v930 = vsub.s32 4, %v906
        %v931 = vsel %vm846, %v930, %v906
        %v932 = vsel %vm845, %v321, %v929
        %v933 = vsel %vm845, 0, %v931
        %v934 = vcosq.f32.pop %v932
        %v935 = vsinq.f32.pop %v932
        %vm936 = vweird.f32 %v321
        %v937 = vadd.s32 %v933, 3
        %v938 = vand.u32 %v937, 3
        %vm939 = vcmp.lt.s32.totalorder %v938, 2
        %vm940 = vcmp.eq.s32.totalorder %v938, 0
        %v941 = vxor.u32 %v935, 2147483648
        %v942 = vsel %vm940, %v934, %v941
        %vm943 = vcmp.eq.s32.totalorder %v938, 2
        %v944 = vxor.u32 %v934, 2147483648
        %v945 = vsel %vm943, %v944, %v935
        %v946 = vsel %vm939, %v942, %v945
        %v947 = vsel %vm936, nan, %v946
        %v948 = vand.u32 2147483647, %v322
        %vm949 = vcmp.le.f32.partialorder %v948, 0.7853982
        %vm950 = vcmp.lt.s32.totalorder %v322, 0
        %v951 = vand.u32 %v322, 2139095040
        %v952 = vshrl.u32 %v951, 23
        %v953 = vsub.s32 %v952, 127
        %v954 = vand.u32 2147483647, %v322
        %v955 = vand.u32 %v954, 8388607
        %v956 = vor.u32 %v955, 8388608
        %v957 = vsub.s32 0, %v956
        %v958 = vadd.s32 %v953, 1
        %vm959 = vcmp.gt.s32.totalorder %v958, 0
        %v960 = vsel %vm959, %v958, 0
        %v961 = vshrl.u32 %v960, 5
        %v962 = vand.u32 %v960, 31
        %v963 = vsub.s32 32, %v962
        %v964 = vshrl.u32 683565275, %v963
        %v965 = vshll.u32 683565275, %v962
        %v966 = vshrl.u32 2475754826, %v963
        %v967 = vor.u32 %v965, %v966
        %v968 = vshll.u32 2475754826, %v962
        %v969 = vshrl.u32 2131351028, %v963
        %v970 = vor.u32 %v968, %v969
        %v971 = vshll.u32 2131351028, %v962
        %v972 = vshrl.u32 2102212464, %v963
        %v973 = vor.u32 %v971, %v972
        %v974 = vshll.u32 2102212464, %v962
        %v975 = vshrl.u32 920167782, %v963
        %v976 = vor.u32 %v974, %v975
        %v977 = vshll.u32 920167782, %v962
        %v978 = vshrl.u32 1326507024, %v963
        %v979 = vor.u32 %v977, %v978
        %vm980 = vcmp.lt.s32.totalorder %v961, 1
        %vm981 = vcmp.lt.s32.totalorder %v961, 2
        %vm982 = vcmp.lt.s32.totalorder %v961, 3
        %vm983 = vcmp.lt.s32.totalorder %v961, 4
        %v984 = vsel %vm980, %v964, %v967
        %v985 = vsel %vm983, %v973, 2102212464
        %v986 = vsel %vm982, %v970, %v985
        %v987 = vsel %vm981, %v984, %v986
        %v988 = vsel %vm980, %v967, %v970
        %v989 = vsel %vm983, %v976, 920167782
        %v990 = vsel %vm982, %v973, %v989
        %v991 = vsel %vm981, %v988, %v990
        %v992 = vsel %vm980, %v970, %v973
        %v993 = vsel %vm983, %v979, 1326507024
        %v994 = vsel %vm982, %v976, %v993
        %v995 = vsel %vm981, %v992, %v994
        %v996 = vshll.u32 %v956, 8
        %v997 = vmul.u32.u64.compose %v996, %v995
        %v998 = vextract.low.u32 %v997
        %v999 = vextract.high.u32 %v997
        %v1000 = vmul.u32.u64.compose %v996, %v991
        %v1001 = vextract.low.u32 %v1000
        %v1002 = vextract.high.u32 %v1000
        %v1003 = vmul.u32 %v996, %v987
        %v1004 = vadd.s32 %v999, %v1001
        %vm1005 = vc.u32 %v999, %v1001
        %v1006 = vadd.s32 %v1002, 1
        %v1007 = vsel %vm1005, %v1006, %v1002
        %v1008 = vadd.s32 %v1003, %v1007
        %v1009 = vadd.s32 %v1008, 536870912
        %v1010 = vshrl.u32 %v1009, 30
        %v1011 = vshll.u32 %v1010, 30
        %v1012 = vsub.s32 %v1008, %v1011
        %vm1013 = vcmp.lt.s32.totalorder %v1012, 0
        %v1014 = vsub.s32 0, %v1012
        %v1015 = vsel %vm1013, %v1014, %v1012
        %v1016 = vclz %v1015
        %v1017 = vsub.s32 %v1016, 2
        %vm1018 = vcmp.gt.s32.totalorder 0, %v1017
        %v1019 = vsel %vm1018, 0, %v1017
        %v1020 = vsub.s32 32, %v1019
        %v1021 = vshll.u32 %v1012, %v1019
        %v1022 = vshrl.u32 %v1004, %v1020
        %v1023 = vor.u32 %v1021, %v1022
        %v1024 = vsub.s32 4294967266, %v1019
        %v1025 = vadd.s32 %v1024, 127
        %v1026 = vshll.u32 %v1025, 23
        %v1027 = vor.u32 4788187, %v1026
        %v1028 = vand.u32 2147483647, %v1027
        %v1030 = vcvt.s32.f32 %v1023
        %v1031 = vmul.f32 %v1030, %v1028
        %v1032 = vxor.u32 %v1031, 2147483648
        %v1033 = vsel %vm950, %v1032, %v1031
        %v1034 = vsub.s32 4, %v1010
        %v1035 = vsel %vm950, %v1034, %v1010
        %v1036 = vsel %vm949, %v322, %v1033
        %v1037 = vsel %vm949, 0, %v1035
        %v1038 = vcosq.f32.pop %v1036
        %v1039 = vsinq.f32.pop %v1036
        %vm1040 = vweird.f32 %v322
        %v1041 = vadd.s32 %v1037, 3
        %v1042 = vand.u32 %v1041, 3
        %vm1043 = vcmp.lt.s32.totalorder %v1042, 2
        %vm1044 = vcmp.eq.s32.totalorder %v1042, 0
        %v1045 = vxor.u32 %v1039, 2147483648
        %v1046 = vsel %vm1044, %v1038, %v1045
        %vm1047 = vcmp.eq.s32.totalorder %v1042, 2
        %v1048 = vxor.u32 %v1038, 2147483648
        %v1049 = vsel %vm1047, %v1048, %v1039
        %v1050 = vsel %vm1043, %v1046, %v1049
        %v1051 = vsel %vm1040, nan, %v1050
        %v1052 = vand.u32 2147483647, %v323
        %vm1053 = vcmp.le.f32.partialorder %v1052, 0.7853982
        %vm1054 = vcmp.lt.s32.totalorder %v323, 0
        %v1055 = vand.u32 %v323, 2139095040
        %v1056 = vshrl.u32 %v1055, 23
        %v1057 = vsub.s32 %v1056, 127
        %v1058 = vand.u32 2147483647, %v323
        %v1059 = vand.u32 %v1058, 8388607
        %v1060 = vor.u32 %v1059, 8388608
        %v1061 = vsub.s32 0, %v1060
        %v1062 = vadd.s32 %v1057, 1
        %vm1063 = vcmp.gt.s32.totalorder %v1062, 0
        %v1064 = vsel %vm1063, %v1062, 0
        %v1065 = vshrl.u32 %v1064, 5
        %v1066 = vand.u32 %v1064, 31
        %v1067 = vsub.s32 32, %v1066
        %v1068 = vshrl.u32 683565275, %v1067
        %v1069 = vshll.u32 683565275, %v1066
        %v1070 = vshrl.u32 2475754826, %v1067
        %v1071 = vor.u32 %v1069, %v1070
        %v1072 = vshll.u32 2475754826, %v1066
        %v1073 = vshrl.u32 2131351028, %v1067
        %v1074 = vor.u32 %v1072, %v1073
        %v1075 = vshll.u32 2131351028, %v1066
        %v1076 = vshrl.u32 2102212464, %v1067
        %v1077 = vor.u32 %v1075, %v1076
        %v1078 = vshll.u32 2102212464, %v1066
        %v1079 = vshrl.u32 920167782, %v1067
        %v1080 = vor.u32 %v1078, %v1079
        %v1081 = vshll.u32 920167782, %v1066
        %v1082 = vshrl.u32 1326507024, %v1067
        %v1083 = vor.u32 %v1081, %v1082
        %vm1084 = vcmp.lt.s32.totalorder %v1065, 1
        %vm1085 = vcmp.lt.s32.totalorder %v1065, 2
        %vm1086 = vcmp.lt.s32.totalorder %v1065, 3
        %vm1087 = vcmp.lt.s32.totalorder %v1065, 4
        %v1088 = vsel %vm1084, %v1068, %v1071
        %v1089 = vsel %vm1087, %v1077, 2102212464
        %v1090 = vsel %vm1086, %v1074, %v1089
        %v1091 = vsel %vm1085, %v1088, %v1090
        %v1092 = vsel %vm1084, %v1071, %v1074
        %v1093 = vsel %vm1087, %v1080, 920167782
        %v1094 = vsel %vm1086, %v1077, %v1093
        %v1095 = vsel %vm1085, %v1092, %v1094
        %v1096 = vsel %vm1084, %v1074, %v1077
        %v1097 = vsel %vm1087, %v1083, 1326507024
        %v1098 = vsel %vm1086, %v1080, %v1097
        %v1099 = vsel %vm1085, %v1096, %v1098
        %v1100 = vshll.u32 %v1060, 8
        %v1101 = vmul.u32.u64.compose %v1100, %v1099
        %v1102 = vextract.low.u32 %v1101
        %v1103 = vextract.high.u32 %v1101
        %v1104 = vmul.u32.u64.compose %v1100, %v1095
        %v1105 = vextract.low.u32 %v1104
        %v1106 = vextract.high.u32 %v1104
        %v1107 = vmul.u32 %v1100, %v1091
        %v1108 = vadd.s32 %v1103, %v1105
        %vm1109 = vc.u32 %v1103, %v1105
        %v1110 = vadd.s32 %v1106, 1
        %v1111 = vsel %vm1109, %v1110, %v1106
        %v1112 = vadd.s32 %v1107, %v1111
        %v1113 = vadd.s32 %v1112, 536870912
        %v1114 = vshrl.u32 %v1113, 30
        %v1115 = vshll.u32 %v1114, 30
        %v1116 = vsub.s32 %v1112, %v1115
        %vm1117 = vcmp.lt.s32.totalorder %v1116, 0
        %v1118 = vsub.s32 0, %v1116
        %v1119 = vsel %vm1117, %v1118, %v1116
        %v1120 = vclz %v1119
        %v1121 = vsub.s32 %v1120, 2
        %vm1122 = vcmp.gt.s32.totalorder 0, %v1121
        %v1123 = vsel %vm1122, 0, %v1121
        %v1124 = vsub.s32 32, %v1123
        %v1125 = vshll.u32 %v1116, %v1123
        %v1126 = vshrl.u32 %v1108, %v1124
        %v1127 = vor.u32 %v1125, %v1126
        %v1128 = vsub.s32 4294967266, %v1123
        %v1129 = vadd.s32 %v1128, 127
        %v1130 = vshll.u32 %v1129, 23
        %v1131 = vor.u32 4788187, %v1130
        %v1132 = vand.u32 2147483647, %v1131
        %v1134 = vcvt.s32.f32 %v1127
        %v1135 = vmul.f32 %v1134, %v1132
        %v1136 = vxor.u32 %v1135, 2147483648
        %v1137 = vsel %vm1054, %v1136, %v1135
        %v1138 = vsub.s32 4, %v1114
        %v1139 = vsel %vm1054, %v1138, %v1114
        %v1140 = vsel %vm1053, %v323, %v1137
        %v1141 = vsel %vm1053, 0, %v1139
        %v1142 = vcosq.f32.pop %v1140
        %v1143 = vsinq.f32.pop %v1140
        %vm1144 = vweird.f32 %v323
        %v1145 = vadd.s32 %v1141, 3
        %v1146 = vand.u32 %v1145, 3
        %vm1147 = vcmp.lt.s32.totalorder %v1146, 2
        %vm1148 = vcmp.eq.s32.totalorder %v1146, 0
        %v1149 = vxor.u32 %v1143, 2147483648
        %v1150 = vsel %vm1148, %v1142, %v1149
        %vm1151 = vcmp.eq.s32.totalorder %v1146, 2
        %v1152 = vxor.u32 %v1142, 2147483648
        %v1153 = vsel %vm1151, %v1152, %v1143
        %v1154 = vsel %vm1147, %v1150, %v1153
        %v1155 = vsel %vm1144, nan, %v1154
        %v1156 = vld [vmem:[%s185] sm:$0xff]
        %v1157 = vld [vmem:[%s185 + $0x8] sm:$0xff]
        %v1158 = vld [vmem:[%s185 + $0x10] sm:$0xff]
        %v1159 = vld [vmem:[%s185 + $0x18] sm:$0xff]
        %v1160 = vld [vmem:[%s185 + $0x20] sm:$0xff]
        %v1161 = vld [vmem:[%s185 + $0x28] sm:$0xff]
        %v1162 = vld [vmem:[%s185 + $0x30] sm:$0xff]
        %v1163 = vld [vmem:[%s185 + $0x38] sm:$0xff]
        %v1164 = vld [vmem:[%s185 + $0x40] sm:$0xff]
        %v1165 = vld [vmem:[%s185 + $0x48] sm:$0xff]
        %v1166 = vld [vmem:[%s185 + $0x50] sm:$0xff]
        %v1167 = vld [vmem:[%s185 + $0x58] sm:$0xff]
        %v1168 = vld [vmem:[%s185 + $0x60] sm:$0xff]
        %v1169 = vld [vmem:[%s185 + $0x68] sm:$0xff]
        %v1170 = vld [vmem:[%s185 + $0x70] sm:$0xff]
        %v1171 = vld [vmem:[%s185 + $0x78] sm:$0xff]
        %v1172 = vadd.f32 %v1156, %v427
        %v1173 = vadd.f32 %v1157, %v531
        %v1174 = vadd.f32 %v1158, %v635
        %v1175 = vadd.f32 %v1159, %v739
        %v1176 = vadd.f32 %v1160, %v843
        %v1177 = vadd.f32 %v1161, %v947
        %v1178 = vadd.f32 %v1162, %v1051
        %v1179 = vadd.f32 %v1163, %v1155
        %v1180 = vadd.f32 %v1164, %v427
        %v1181 = vadd.f32 %v1165, %v531
        %v1182 = vadd.f32 %v1166, %v635
        %v1183 = vadd.f32 %v1167, %v739
        %v1184 = vadd.f32 %v1168, %v843
        %v1185 = vadd.f32 %v1169, %v947
        %v1186 = vadd.f32 %v1170, %v1051
        %v1187 = vadd.f32 %v1171, %v1155
        %1188 = vst [vmem:[%s205] sm:$0xff] %v1172
        %1189 = vst [vmem:[%s205 + $0x8] sm:$0xff] %v1173
        %1190 = vst [vmem:[%s205 + $0x10] sm:$0xff] %v1174
        %1191 = vst [vmem:[%s205 + $0x18] sm:$0xff] %v1175
        %1192 = vst [vmem:[%s205 + $0x20] sm:$0xff] %v1176
        %1193 = vst [vmem:[%s205 + $0x28] sm:$0xff] %v1177
        %1194 = vst [vmem:[%s205 + $0x30] sm:$0xff] %v1178
        %1195 = vst [vmem:[%s205 + $0x38] sm:$0xff] %v1179
        %1196 = vst [vmem:[%s205 + $0x40] sm:$0xff] %v1180
        %1197 = vst [vmem:[%s205 + $0x48] sm:$0xff] %v1181
        %1198 = vst [vmem:[%s205 + $0x50] sm:$0xff] %v1182
        %1199 = vst [vmem:[%s205 + $0x58] sm:$0xff] %v1183
        %1200 = vst [vmem:[%s205 + $0x60] sm:$0xff] %v1184
        %1201 = vst [vmem:[%s205 + $0x68] sm:$0xff] %v1185
        %1202 = vst [vmem:[%s205 + $0x70] sm:$0xff] %v1186
        %1203 = vst [vmem:[%s205 + $0x78] sm:$0xff] %v1187
        %s1204 = sand.u32 %s90, 1
        %s1205 = scalar_lea.sflag [#allocation4], %s1204
        %s1206 = sand.u32 %s90, 1
        %s1207 = smul.addr %s1206, 128
        %s1208 = scalar_lea.vmem [#allocation5], %s1207
        // Predicated region
        $region33: #{tpu_custom_call.1} parent=27 // pred_check
          %p1209 = pneg %p100
        $region34: #{tpu_custom_call.1} parent=27 // pred_check_branch
          %1211 = sbr.rel (%p1209) target = $region36
        $region35: #{tpu_custom_call.1} parent=27 // pred_region
          #allocation9 [shape = 'u32[6]{0}', space=smem, size = 0x18, scoped, tag = 'DMA stride descriptor']
          %s1212 = smul.u32 2, %s23
          %s1213 = smul.u32 8, %s24
          %s1215 = ssub.s32 2048, 2048
          %1216 = vsyncadd %s1205, %s1215
          %s1217 = smul.addr %s1212, 32
          %s1218 = sadd.s32 %s1213, %s1217
          %s1219 = smul.addr %s1218, 128
          %s1220 = scalar_lea.hbm %s2, %s1219
          %s1222 = sshll.u32 1, 14
          %s1223 = sxor.u32 4294967295, %s1222
          %s1226 = sshll.u32 7, 18
          %s1227 = sxor.u32 4294967295, %s1226
          %s1228 = sand.u32 0, %s1227
          %s1230 = sor.u32 %s1228, 0
          %s1232 = sshll.u32 3, 24
          %s1233 = sxor.u32 4294967295, %s1232
          %s1234 = sand.u32 %s1230, %s1233
          %s1236 = sor.u32 %s1234, 0
          %s1237 = sshll.u32 %s1208, 4
          %s1238 = int_to_ptr.vmem [resolvable:$true] %s1237
          %1244 = sst [smem:[#allocation9]] 1024
          %s1245 = scalar_lea.smem [#allocation9], 1
          %1246 = sst [smem:[%s1245]] 4096
          %s1247 = scalar_lea.smem [#allocation9], 2
          %1248 = sst [smem:[%s1247]] 8
          %s1249 = scalar_lea.smem [#allocation9], 3
          %1250 = sst [smem:[%s1249]] 128
          %s1251 = scalar_lea.smem [#allocation9], 4
          %1252 = sst [smem:[%s1251]] 128
          %s1253 = scalar_lea.smem [#allocation9], 5
          %1254 = sst [smem:[%s1253]] 8
          %1256 = dma.general %s1238, 2048, %s1220, %s1205, [#allocation8], [#allocation9], %s1236, 0
        $region36: #{tpu_custom_call.1} parent=27 // pred_fallthru
          _
      $region28: #{tpu_custom_call.1} parent=5 // pred_fallthru
        _
      %p1257 = scmp.le.s32.totalorder 2, %s14
      // Predicated region
      $region37: #{tpu_custom_call.1} parent=5 // pred_check
        %p1258 = pneg %p1257
      $region38: #{tpu_custom_call.1} parent=5 // pred_check_branch
        %1260 = sbr.rel (%p1258) target = $region40
      $region39: #{tpu_custom_call.1} parent=5 // pred_region
        %s1261 = ssub.s32 %s14, 2
        // Predicated region
        $region41: #{tpu_custom_call.1} parent=39 // pred_check
          %p1262 = pneg %p106
        $region42: #{tpu_custom_call.1} parent=39 // pred_check_branch
          %1264 = sbr.rel (%p1262) target = $region44
        $region43: #{tpu_custom_call.1} parent=39 // pred_region
          %s1265 = sand.u32 %s91, 1
          %s1266 = scalar_lea.sflag [#allocation4], %s1265
          %s1267 = sand.u32 %s91, 1
          %s1268 = smul.addr %s1267, 128
          %s1269 = scalar_lea.vmem [#allocation5], %s1268
          %1270 = dma.done %s1266, 2048
        $region44: #{tpu_custom_call.1} parent=39 // pred_fallthru
          _
      $region40: #{tpu_custom_call.1} parent=5 // pred_fallthru
        _
    $region6: #{tpu_custom_call.1} parent=1 // loop_footer
      %s18 = sadd.s32 1, %s14
    $region7: #{tpu_custom_call.1} parent=1 // loop_footer_branch
      %13 = sbr.rel target = $region3
    $region8: #{tpu_custom_call.1} parent=1 // loop_exit
      _
    %1271 = vsyncpa [#allocation3], 1
    %s1272 = scalar_lea.sflag [#allocation3], 1
    %1273 = vsyncpa %s1272, 1
    %1274 = vsyncpa [#allocation4], 1
    %s1275 = scalar_lea.sflag [#allocation4], 1
    %1276 = vsyncpa %s1275, 1

</llo_original>
